<compile_context>
chip_gen: v7x
topology: tpu7x:2x2x1
jax: 0.10.0
libtpu: 0.0.40
codegen_flags: <defaults>
</compile_context>

<pallas_src>
import functools

import jax
import jax.numpy as jnp
from jax.experimental import pallas as pl
from jax.experimental.pallas import tpu as pltpu

EPS = 1e-5


def _round_up(x, m):
    return ((x + m - 1) // m) * m


def _edl_kernel(pred_ref, esum_ref, tgt_ref, out_ref,
                acc_mean, acc_cor, acc_inc, acc_nc, *, n_valid, kf, has_pad):
    s_idx = pl.program_id(1)

    @pl.when(s_idx == 0)
    def _init():
        acc_mean[...] = jnp.zeros_like(acc_mean)
        acc_cor[...] = jnp.zeros_like(acc_cor)
        acc_inc[...] = jnp.zeros_like(acc_inc)
        acc_nc[...] = jnp.zeros_like(acc_nc)

    pred = pred_ref[...].astype(jnp.float32)      # (K, T): batch on lanes
    es_raw = esum_ref[...].astype(jnp.float32)    # (1, T)
    tgt = tgt_ref[...]                            # (1, T) int32

    K, T = pred.shape
    iota_k = jax.lax.broadcasted_iota(jnp.int32, (K, T), 0)
    onehot = iota_k == tgt                        # (K, T) in-kernel one-hot

    # ---- softmax over the class (sublane) axis; only gt column is needed ----
    m = jnp.max(pred, axis=0, keepdims=True)                       # (1, T)
    ex = jnp.exp(pred - m)                                         # (K, T)
    inv_den = pl.reciprocal(jnp.sum(ex, axis=0, keepdims=True), approx=True)
    ex_gt = jnp.sum(jnp.where(onehot, ex, 0.0), axis=0, keepdims=True)
    p_gt_soft = ex_gt * inv_den                                    # softmax@gt

    # ---- softplus (torch default beta=1, threshold=20) ----
    e_sum = jnp.where(es_raw > 20.0, es_raw,
                      jnp.log1p(jnp.exp(jnp.minimum(es_raw, 20.0))))

    s = e_sum + kf                     # sum(alpha) == e_sum + K (identity)
    inv_s = pl.reciprocal(s, approx=True)
    u = kf * inv_s                     # K / s
    one_minus_u = e_sum * inv_s        # 1 - u, computed as (s - K)/s

    alpha_gt = e_sum * p_gt_soft + 1.0
    p_gt = alpha_gt * inv_s            # (alpha / s) at the gt column

    ce_row = -jnp.log(p_gt + EPS)                      # (1, T)
    xcor_row = -u * jnp.log(p_gt_soft + EPS)           # (1, T)

    # argmax(p2) == argmax(pred); torch-style first-index tie-break
    preds = jnp.min(jnp.where(pred == m, iota_k, K), axis=0, keepdims=True)
    is_correct = (preds == tgt).astype(jnp.float32)    # (1, T)

    l_euc_ce = (-p_gt * jnp.log(one_minus_u + EPS)
                - (1.0 - p_gt) * jnp.log(u + EPS))

    contrib_mean = ce_row + xcor_row
    contrib_cor = is_correct * l_euc_ce
    contrib_inc = (1.0 - is_correct) * l_euc_ce
    contrib_nc = is_correct

    if has_pad:  # static: only emitted when N was padded up to the tile grid
        g = pl.program_id(0) * pl.num_programs(1) + s_idx
        row = g * T + jax.lax.broadcasted_iota(jnp.int32, (1, T), 1)
        valid = row < n_valid
        zero = jnp.float32(0.0)
        contrib_mean = jnp.where(valid, contrib_mean, zero)
        contrib_cor = jnp.where(valid, contrib_cor, zero)
        contrib_inc = jnp.where(valid, contrib_inc, zero)
        contrib_nc = jnp.where(valid, contrib_nc, zero)

    acc_mean[...] += contrib_mean
    acc_cor[...] += contrib_cor
    acc_inc[...] += contrib_inc
    acc_nc[...] += contrib_nc

    @pl.when(s_idx == pl.num_programs(1) - 1)
    def _finalize():
        # pack the 4 per-shard partial sums into lanes 0..3 of a dense row
        lane = jax.lax.broadcasted_iota(jnp.int32, (1, 128), 1)
        sm = jnp.sum(acc_mean[...], axis=1, keepdims=True)   # (1, 1)
        sc = jnp.sum(acc_cor[...], axis=1, keepdims=True)
        si = jnp.sum(acc_inc[...], axis=1, keepdims=True)
        nc = jnp.sum(acc_nc[...], axis=1, keepdims=True)
        out_ref[...] = (jnp.where(lane == 0, sm, 0.0)
                        + jnp.where(lane == 1, sc, 0.0)
                        + jnp.where(lane == 2, si, 0.0)
                        + jnp.where(lane == 3, nc, 0.0))


def edl_loss_rx_cor_pallas(pred, e_sum, target, *, lambdat=1.0, loss_weight=1.0,
                           current_epoch=None, tile_n=2048, num_shards=2):
    """Mirrors EDLLossRXCor.forward (reduction='mean', weight=None)."""
    assert current_epoch is not None, "current_epoch must be a static Python int"
    N, K = pred.shape
    lam = min(lambdat, lambdat * (current_epoch - 1) / 10)

    # lane-dense layout: batch N on the 128-lane axis
    pred_t = jnp.transpose(pred, (1, 0))          # (K, N)
    es = e_sum.reshape(1, N)
    tgt = target.reshape(1, N).astype(jnp.int32)

    tile = min(_round_up(tile_n, 128), _round_up(N, 128))
    blocks = pl.cdiv(N, tile)
    shards = num_shards if blocks >= num_shards else 1
    blocks = _round_up(blocks, shards)
    steps = blocks // shards
    n_pad = blocks * tile
    if n_pad != N:
        pred_t = jnp.pad(pred_t, ((0, 0), (0, n_pad - N)))
        es = jnp.pad(es, ((0, 0), (0, n_pad - N)))
        tgt = jnp.pad(tgt, ((0, 0), (0, n_pad - N)))

    kernel = functools.partial(_edl_kernel, n_valid=N, kf=float(K),
                               has_pad=(n_pad != N))
    parts = pl.pallas_call(
        kernel,
        out_shape=jax.ShapeDtypeStruct((shards, 128), jnp.float32),
        grid_spec=pltpu.PrefetchScalarGridSpec(
            num_scalar_prefetch=0,
            grid=(shards, steps),
            in_specs=[
                pl.BlockSpec((K, tile), lambda c, s: (0, c * steps + s)),   # pred^T
                pl.BlockSpec((1, tile), lambda c, s: (0, c * steps + s)),   # e_sum row
                pl.BlockSpec((1, tile), lambda c, s: (0, c * steps + s)),   # target row
            ],
            out_specs=pl.BlockSpec((1, 128), lambda c, s: (c, 0)),
            scratch_shapes=[pltpu.VMEM((1, tile), jnp.float32)] * 4,
        ),
        compiler_params=pltpu.CompilerParams(
            dimension_semantics=("parallel", "arbitrary")),
    )(pred_t, es, tgt)

    # combine per-shard partial sums; scalar math stays in the wrapper
    sum_mean = jnp.sum(parts[:, 0])
    sum_cor = jnp.sum(parts[:, 1])
    sum_inc = jnp.sum(parts[:, 2])
    n_cor = jnp.sum(parts[:, 3])
    n_inc = jnp.float32(N) - n_cor
    # NOTE: like the PyTorch reference, an all-correct / all-incorrect batch
    # yields 0/0 -> NaN; that hazard is preserved intentionally.
    l_euc = lam * (sum_cor / n_cor * 0.1 + sum_inc / n_inc * 0.5)
    return loss_weight * (sum_mean / jnp.float32(N) + l_euc)


# ---- pure-JAX reference (mirrors the PyTorch code line-by-line) ----
def _edl_loss_ref(pred, e_sum, target, *, lambdat, loss_weight, current_epoch):
    K = pred.shape[-1]
    lam = min(lambdat, lambdat * (current_epoch - 1) / 10)
    tgt = jax.nn.one_hot(target, K, dtype=jnp.float32)
    p = jax.nn.softmax(pred, axis=1)
    es = jnp.where(e_sum > 20.0, e_sum, jnp.log1p(jnp.exp(jnp.minimum(e_sum, 20.0))))
    Kf = float(K)
    s = es + Kf
    alpha = es * p + 1.0
    loss_ce = jnp.mean(jnp.sum(-tgt * jnp.log(alpha / s + EPS), axis=1))
    u = Kf / s
    s2 = jnp.sum(alpha, axis=1, keepdims=True)
    p2 = alpha / s2
    u2 = Kf / s2
    p_gt = jnp.sum(jnp.where(tgt == 1.0, p2, 0.0), axis=1, keepdims=True)
    preds = jnp.argmax(p2, axis=1)
    gt = jnp.argmax(tgt, axis=1)
    is_correct = (preds == gt).astype(jnp.float32)[:, None]
    num_correct = jnp.sum(is_correct)
    num_incorrect = float(pred.shape[0]) - num_correct
    l_euc_ce = -p_gt * jnp.log(1.0 - u2 + EPS) - (1.0 - p_gt) * jnp.log(u2 + EPS)
    l_euc = lam * (jnp.sum(is_correct * l_euc_ce) / num_correct * 0.1
                   + jnp.sum((1.0 - is_correct) * l_euc_ce) / num_incorrect * 0.5)
    l_xcor = jnp.mean(jnp.sum(-tgt * u * jnp.log(p + EPS), axis=1))
    return loss_weight * (loss_ce + l_euc + l_xcor)


if __name__ == "__main__":
    N, K = 64, 16
    key = jax.random.PRNGKey(0)
    k1, k2, k3 = jax.random.split(key, 3)

    target = jax.random.randint(k1, (N,), 0, K)
    pred = jax.random.normal(k2, (N, K), dtype=jnp.float32)
    # bias half the rows toward the ground-truth class so the batch contains
    # both correctly and incorrectly classified samples (avoids 0/0 terms).
    bias_mask = (jnp.arange(N) % 2 == 0).astype(jnp.float32)[:, None]
    pred = pred + 4.0 * bias_mask * jax.nn.one_hot(target, K, dtype=jnp.float32)
    e_sum = jax.random.normal(k3, (N, 1), dtype=jnp.float32)

    current_epoch = 5
    loss = edl_loss_rx_cor_pallas(pred, e_sum, target, lambdat=1.0,
                                  loss_weight=1.0, current_epoch=current_epoch)
    loss = jax.block_until_ready(loss)

    ref = _edl_loss_ref(pred, e_sum, target, lambdat=1.0, loss_weight=1.0,
                        current_epoch=current_epoch)
    assert jnp.isfinite(loss), f"non-finite loss: {loss}"
    # tolerance accounts for approx-reciprocal + exact algebraic rewrites
    assert jnp.allclose(loss, ref, rtol=5e-3, atol=5e-3), (loss, ref)
    print("KERNEL_OK")
</pallas_src>

<mosaic_0001>
module attributes {stable_mosaic.version = 11 : i64} {
  func.func @_edl_kernel(%arg0: i32, %arg1: i32, %arg2: memref<16x128xf32, #tpu.memory_space<vmem>>, %arg3: memref<1x128xf32, #tpu.memory_space<vmem>>, %arg4: memref<1x128xi32, #tpu.memory_space<vmem>>, %arg5: memref<1x128xf32, #tpu.memory_space<vmem>>, %arg6: memref<1x128xf32, #tpu.memory_space<vmem>>, %arg7: memref<1x128xf32, #tpu.memory_space<vmem>>, %arg8: memref<1x128xf32, #tpu.memory_space<vmem>>, %arg9: memref<1x128xf32, #tpu.memory_space<vmem>>) attributes {dimension_semantics = [#tpu.dimension_semantics<parallel>, #tpu.dimension_semantics<arbitrary>], iteration_bounds = array<i64: 1, 1>, scalar_prefetch = 0 : i64, scratch_operands = 4 : i64, tpu.core_type = #tpu.core_type<tc>, window_params = [{transform_indices = @transform_0, window_bounds = array<i64: 16, 128>}, {transform_indices = @transform_1, window_bounds = array<i64: 1, 128>}, {transform_indices = @transform_2, window_bounds = array<i64: 1, 128>}, {transform_indices = @transform_3, window_bounds = array<i64: 1, 128>}]} {
    %c0_i32 = arith.constant 0 : i32
    %0 = arith.cmpi eq, %arg1, %c0_i32 : i32
    %1 = arith.extui %0 : i1 to i32
    %c0_i32_0 = arith.constant 0 : i32
    %2 = arith.cmpi ne, %1, %c0_i32_0 : i32
    scf.if %2 {
      %cst_46 = arith.constant 0.000000e+00 : f32
      %108 = vector.broadcast %cst_46 : f32 to vector<1x128xf32>
      %c0_47 = arith.constant 0 : index
      %c0_48 = arith.constant 0 : index
      %109 = vector.load %arg6[%c0_47, %c0_48] : memref<1x128xf32, #tpu.memory_space<vmem>>, vector<1x128xf32>
      tpu.vector_store %arg6[%c0_47, %c0_48], %108 {strides = array<i32>} : memref<1x128xf32, #tpu.memory_space<vmem>>, vector<1x128xf32>,
      %cst_49 = arith.constant 0.000000e+00 : f32
      %110 = vector.broadcast %cst_49 : f32 to vector<1x128xf32>
      %c0_50 = arith.constant 0 : index
      %c0_51 = arith.constant 0 : index
      %111 = vector.load %arg7[%c0_50, %c0_51] : memref<1x128xf32, #tpu.memory_space<vmem>>, vector<1x128xf32>
      tpu.vector_store %arg7[%c0_50, %c0_51], %110 {strides = array<i32>} : memref<1x128xf32, #tpu.memory_space<vmem>>, vector<1x128xf32>,
      %cst_52 = arith.constant 0.000000e+00 : f32
      %112 = vector.broadcast %cst_52 : f32 to vector<1x128xf32>
      %c0_53 = arith.constant 0 : index
      %c0_54 = arith.constant 0 : index
      %113 = vector.load %arg8[%c0_53, %c0_54] : memref<1x128xf32, #tpu.memory_space<vmem>>, vector<1x128xf32>
      tpu.vector_store %arg8[%c0_53, %c0_54], %112 {strides = array<i32>} : memref<1x128xf32, #tpu.memory_space<vmem>>, vector<1x128xf32>,
      %cst_55 = arith.constant 0.000000e+00 : f32
      %114 = vector.broadcast %cst_55 : f32 to vector<1x128xf32>
      %c0_56 = arith.constant 0 : index
      %c0_57 = arith.constant 0 : index
      %115 = vector.load %arg9[%c0_56, %c0_57] : memref<1x128xf32, #tpu.memory_space<vmem>>, vector<1x128xf32>
      tpu.vector_store %arg9[%c0_56, %c0_57], %114 {strides = array<i32>} : memref<1x128xf32, #tpu.memory_space<vmem>>, vector<1x128xf32>,
    } else {
    }
    %c0 = arith.constant 0 : index
    %c0_1 = arith.constant 0 : index
    %3 = vector.load %arg2[%c0, %c0_1] : memref<16x128xf32, #tpu.memory_space<vmem>>, vector<16x128xf32>
    %c0_2 = arith.constant 0 : index
    %c0_3 = arith.constant 0 : index
    %4 = vector.load %arg3[%c0_2, %c0_3] : memref<1x128xf32, #tpu.memory_space<vmem>>, vector<1x128xf32>
    %c0_4 = arith.constant 0 : index
    %c0_5 = arith.constant 0 : index
    %5 = vector.load %arg4[%c0_4, %c0_5] : memref<1x128xi32, #tpu.memory_space<vmem>>, vector<1x128xi32>
    %6 = tpu.iota {dimensions = array<i32: 0>} : vector<16x128xi32>
    %7 = vector.broadcast %5 : vector<1x128xi32> to vector<16x128xi32>
    %8 = arith.cmpi eq, %6, %7 : vector<16x128xi32>
    %cst = arith.constant dense<0xFF800000> : vector<128xf32>
    %9 = vector.multi_reduction <maximumf>, %3, %cst [0] : vector<16x128xf32> to vector<128xf32>
    %10 = vector.shape_cast %9 : vector<128xf32> to vector<1x128xf32>
    %11 = vector.broadcast %10 : vector<1x128xf32> to vector<16x128xf32>
    %12 = arith.subf %3, %11 : vector<16x128xf32>
    %13 = math.exp %12 : vector<16x128xf32>
    %cst_6 = arith.constant dense<0.000000e+00> : vector<128xf32>
    %14 = vector.multi_reduction <add>, %13, %cst_6 [0] : vector<16x128xf32> to vector<128xf32>
    %15 = vector.shape_cast %14 : vector<128xf32> to vector<1x128xf32>
    %16 = tpu.reciprocal %15 {approx = true} : vector<1x128xf32> -> vector<1x128xf32>
    %cst_7 = arith.constant 0.000000e+00 : f32
    %17 = vector.broadcast %cst_7 : f32 to vector<16x128xf32>
    %18 = arith.select %8, %13, %17 : vector<16x128xi1>, vector<16x128xf32>
    %cst_8 = arith.constant dense<0.000000e+00> : vector<128xf32>
    %19 = vector.multi_reduction <add>, %18, %cst_8 [0] : vector<16x128xf32> to vector<128xf32>
    %20 = vector.shape_cast %19 : vector<128xf32> to vector<1x128xf32>
    %21 = arith.mulf %20, %16 : vector<1x128xf32>
    %cst_9 = arith.constant 2.000000e+01 : f32
    %22 = vector.broadcast %cst_9 : f32 to vector<1x128xf32>
    %23 = arith.cmpf ogt, %4, %22 : vector<1x128xf32>
    %cst_10 = arith.constant 2.000000e+01 : f32
    %24 = vector.broadcast %cst_10 : f32 to vector<1x128xf32>
    %25 = arith.minimumf %4, %24 : vector<1x128xf32>
    %26 = math.exp %25 : vector<1x128xf32>
    %27 = math.log1p %26 : vector<1x128xf32>
    %28 = arith.select %23, %4, %27 : vector<1x128xi1>, vector<1x128xf32>
    %cst_11 = arith.constant 1.600000e+01 : f32
    %29 = vector.broadcast %cst_11 : f32 to vector<1x128xf32>
    %30 = arith.addf %28, %29 : vector<1x128xf32>
    %31 = tpu.reciprocal %30 {approx = true} : vector<1x128xf32> -> vector<1x128xf32>
    %cst_12 = arith.constant 1.600000e+01 : f32
    %32 = vector.broadcast %cst_12 : f32 to vector<1x128xf32>
    %33 = arith.mulf %32, %31 : vector<1x128xf32>
    %34 = arith.mulf %28, %31 : vector<1x128xf32>
    %35 = arith.mulf %28, %21 : vector<1x128xf32>
    %cst_13 = arith.constant 1.000000e+00 : f32
    %36 = vector.broadcast %cst_13 : f32 to vector<1x128xf32>
    %37 = arith.addf %35, %36 : vector<1x128xf32>
    %38 = arith.mulf %37, %31 : vector<1x128xf32>
    %cst_14 = arith.constant 9.99999974E-6 : f32
    %39 = vector.broadcast %cst_14 : f32 to vector<1x128xf32>
    %40 = arith.addf %38, %39 : vector<1x128xf32>
    %41 = math.log %40 : vector<1x128xf32>
    %cst_15 = arith.constant 0.000000e+00 : f32
    %42 = vector.broadcast %cst_15 : f32 to vector<1x128xf32>
    %43 = arith.subf %42, %41 : vector<1x128xf32>
    %cst_16 = arith.constant 0.000000e+00 : f32
    %44 = vector.broadcast %cst_16 : f32 to vector<1x128xf32>
    %45 = arith.subf %44, %33 : vector<1x128xf32>
    %cst_17 = arith.constant 9.99999974E-6 : f32
    %46 = vector.broadcast %cst_17 : f32 to vector<1x128xf32>
    %47 = arith.addf %21, %46 : vector<1x128xf32>
    %48 = math.log %47 : vector<1x128xf32>
    %49 = arith.mulf %45, %48 : vector<1x128xf32>
    %50 = vector.broadcast %10 : vector<1x128xf32> to vector<16x128xf32>
    %51 = arith.cmpf oeq, %3, %50 : vector<16x128xf32>
    %c16_i32 = arith.constant 16 : i32
    %52 = vector.broadcast %c16_i32 : i32 to vector<16x128xi32>
    %53 = arith.select %51, %6, %52 : vector<16x128xi1>, vector<16x128xi32>
    %cst_18 = arith.constant dense<2147483647> : vector<128xi32>
    %54 = vector.multi_reduction <minsi>, %53, %cst_18 [0] : vector<16x128xi32> to vector<128xi32>
    %55 = vector.shape_cast %54 : vector<128xi32> to vector<1x128xi32>
    %56 = arith.cmpi eq, %55, %5 : vector<1x128xi32>
    %57 = arith.extui %56 : vector<1x128xi1> to vector<1x128xi32>
    %58 = arith.sitofp %57 : vector<1x128xi32> to vector<1x128xf32>
    %cst_19 = arith.constant 0.000000e+00 : f32
    %59 = vector.broadcast %cst_19 : f32 to vector<1x128xf32>
    %60 = arith.subf %59, %38 : vector<1x128xf32>
    %cst_20 = arith.constant 9.99999974E-6 : f32
    %61 = vector.broadcast %cst_20 : f32 to vector<1x128xf32>
    %62 = arith.addf %34, %61 : vector<1x128xf32>
    %63 = math.log %62 : vector<1x128xf32>
    %64 = arith.mulf %60, %63 : vector<1x128xf32>
    %cst_21 = arith.constant 1.000000e+00 : f32
    %65 = vector.broadcast %cst_21 : f32 to vector<1x128xf32>
    %66 = arith.subf %65, %38 : vector<1x128xf32>
    %cst_22 = arith.constant 9.99999974E-6 : f32
    %67 = vector.broadcast %cst_22 : f32 to vector<1x128xf32>
    %68 = arith.addf %33, %67 : vector<1x128xf32>
    %69 = math.log %68 : vector<1x128xf32>
    %70 = arith.mulf %66, %69 : vector<1x128xf32>
    %71 = arith.subf %64, %70 : vector<1x128xf32>
    %72 = arith.addf %43, %49 : vector<1x128xf32>
    %73 = arith.mulf %58, %71 : vector<1x128xf32>
    %cst_23 = arith.constant 1.000000e+00 : f32
    %74 = vector.broadcast %cst_23 : f32 to vector<1x128xf32>
    %75 = arith.subf %74, %58 : vector<1x128xf32>
    %76 = arith.mulf %75, %71 : vector<1x128xf32>
    %c1_i32 = arith.constant 1 : i32
    %77 = arith.muli %arg0, %c1_i32 : i32
    %78 = arith.addi %77, %arg1 : i32
    %c128_i32 = arith.constant 128 : i32
    %79 = arith.muli %78, %c128_i32 : i32
    %80 = tpu.iota {dimensions = array<i32: 1>} : vector<1x128xi32>
    %81 = vector.broadcast %79 : i32 to vector<1x128xi32>
    %82 = arith.addi %81, %80 : vector<1x128xi32>
    %c64_i32 = arith.constant 64 : i32
    %83 = vector.broadcast %c64_i32 : i32 to vector<1x128xi32>
    %84 = arith.cmpi slt, %82, %83 : vector<1x128xi32>
    %cst_24 = arith.constant 0.000000e+00 : f32
    %85 = vector.broadcast %cst_24 : f32 to vector<1x128xf32>
    %86 = arith.select %84, %72, %85 : vector<1x128xi1>, vector<1x128xf32>
    %cst_25 = arith.constant 0.000000e+00 : f32
    %87 = vector.broadcast %cst_25 : f32 to vector<1x128xf32>
    %88 = arith.select %84, %73, %87 : vector<1x128xi1>, vector<1x128xf32>
    %cst_26 = arith.constant 0.000000e+00 : f32
    %89 = vector.broadcast %cst_26 : f32 to vector<1x128xf32>
    %90 = arith.select %84, %76, %89 : vector<1x128xi1>, vector<1x128xf32>
    %cst_27 = arith.constant 0.000000e+00 : f32
    %91 = vector.broadcast %cst_27 : f32 to vector<1x128xf32>
    %92 = arith.select %84, %58, %91 : vector<1x128xi1>, vector<1x128xf32>
    %c0_28 = arith.constant 0 : index
    %c0_29 = arith.constant 0 : index
    %93 = vector.load %arg6[%c0_28, %c0_29] : memref<1x128xf32, #tpu.memory_space<vmem>>, vector<1x128xf32>
    %94 = arith.addf %93, %86 : vector<1x128xf32>
    %c0_30 = arith.constant 0 : index
    %c0_31 = arith.constant 0 : index
    %95 = vector.load %arg6[%c0_30, %c0_31] : memref<1x128xf32, #tpu.memory_space<vmem>>, vector<1x128xf32>
    tpu.vector_store %arg6[%c0_30, %c0_31], %94 {strides = array<i32>} : memref<1x128xf32, #tpu.memory_space<vmem>>, vector<1x128xf32>,
    %c0_32 = arith.constant 0 : index
    %c0_33 = arith.constant 0 : index
    %96 = vector.load %arg7[%c0_32, %c0_33] : memref<1x128xf32, #tpu.memory_space<vmem>>, vector<1x128xf32>
    %97 = arith.addf %96, %88 : vector<1x128xf32>
    %c0_34 = arith.constant 0 : index
    %c0_35 = arith.constant 0 : index
    %98 = vector.load %arg7[%c0_34, %c0_35] : memref<1x128xf32, #tpu.memory_space<vmem>>, vector<1x128xf32>
    tpu.vector_store %arg7[%c0_34, %c0_35], %97 {strides = array<i32>} : memref<1x128xf32, #tpu.memory_space<vmem>>, vector<1x128xf32>,
    %c0_36 = arith.constant 0 : index
    %c0_37 = arith.constant 0 : index
    %99 = vector.load %arg8[%c0_36, %c0_37] : memref<1x128xf32, #tpu.memory_space<vmem>>, vector<1x128xf32>
    %100 = arith.addf %99, %90 : vector<1x128xf32>
    %c0_38 = arith.constant 0 : index
    %c0_39 = arith.constant 0 : index
    %101 = vector.load %arg8[%c0_38, %c0_39] : memref<1x128xf32, #tpu.memory_space<vmem>>, vector<1x128xf32>
    tpu.vector_store %arg8[%c0_38, %c0_39], %100 {strides = array<i32>} : memref<1x128xf32, #tpu.memory_space<vmem>>, vector<1x128xf32>,
    %c0_40 = arith.constant 0 : index
    %c0_41 = arith.constant 0 : index
    %102 = vector.load %arg9[%c0_40, %c0_41] : memref<1x128xf32, #tpu.memory_space<vmem>>, vector<1x128xf32>
    %103 = arith.addf %102, %92 : vector<1x128xf32>
    %c0_42 = arith.constant 0 : index
    %c0_43 = arith.constant 0 : index
    %104 = vector.load %arg9[%c0_42, %c0_43] : memref<1x128xf32, #tpu.memory_space<vmem>>, vector<1x128xf32>
    tpu.vector_store %arg9[%c0_42, %c0_43], %103 {strides = array<i32>} : memref<1x128xf32, #tpu.memory_space<vmem>>, vector<1x128xf32>,
    %c0_i32_44 = arith.constant 0 : i32
    %105 = arith.cmpi eq, %arg1, %c0_i32_44 : i32
    %106 = arith.extui %105 : i1 to i32
    %c0_i32_45 = arith.constant 0 : i32
    %107 = arith.cmpi ne, %106, %c0_i32_45 : i32
    scf.if %107 {
      %108 = tpu.iota {dimensions = array<i32: 1>} : vector<1x128xi32>
      %c0_46 = arith.constant 0 : index
      %c0_47 = arith.constant 0 : index
      %109 = vector.load %arg6[%c0_46, %c0_47] : memref<1x128xf32, #tpu.memory_space<vmem>>, vector<1x128xf32>
      %cst_48 = arith.constant dense<0.000000e+00> : vector<1xf32>
      %110 = vector.multi_reduction <add>, %109, %cst_48 [1] : vector<1x128xf32> to vector<1xf32>
      %111 = vector.shape_cast %110 : vector<1xf32> to vector<1x1xf32>
      %c0_49 = arith.constant 0 : index
      %c0_50 = arith.constant 0 : index
      %112 = vector.load %arg7[%c0_49, %c0_50] : memref<1x128xf32, #tpu.memory_space<vmem>>, vector<1x128xf32>
      %cst_51 = arith.constant dense<0.000000e+00> : vector<1xf32>
      %113 = vector.multi_reduction <add>, %112, %cst_51 [1] : vector<1x128xf32> to vector<1xf32>
      %114 = vector.shape_cast %113 : vector<1xf32> to vector<1x1xf32>
      %c0_52 = arith.constant 0 : index
      %c0_53 = arith.constant 0 : index
      %115 = vector.load %arg8[%c0_52, %c0_53] : memref<1x128xf32, #tpu.memory_space<vmem>>, vector<1x128xf32>
      %cst_54 = arith.constant dense<0.000000e+00> : vector<1xf32>
      %116 = vector.multi_reduction <add>, %115, %cst_54 [1] : vector<1x128xf32> to vector<1xf32>
      %117 = vector.shape_cast %116 : vector<1xf32> to vector<1x1xf32>
      %c0_55 = arith.constant 0 : index
      %c0_56 = arith.constant 0 : index
      %118 = vector.load %arg9[%c0_55, %c0_56] : memref<1x128xf32, #tpu.memory_space<vmem>>, vector<1x128xf32>
      %cst_57 = arith.constant dense<0.000000e+00> : vector<1xf32>
      %119 = vector.multi_reduction <add>, %118, %cst_57 [1] : vector<1x128xf32> to vector<1xf32>
      %120 = vector.shape_cast %119 : vector<1xf32> to vector<1x1xf32>
      %c0_i32_58 = arith.constant 0 : i32
      %121 = vector.broadcast %c0_i32_58 : i32 to vector<1x128xi32>
      %122 = arith.cmpi eq, %108, %121 : vector<1x128xi32>
      %cst_59 = arith.constant 0.000000e+00 : f32
      %123 = vector.shape_cast %111 : vector<1x1xf32> to vector<1x1xf32>
      %124 = vector.broadcast %123 : vector<1x1xf32> to vector<1x128xf32>
      %125 = vector.broadcast %cst_59 : f32 to vector<1x128xf32>
      %126 = arith.select %122, %124, %125 : vector<1x128xi1>, vector<1x128xf32>
      %c1_i32_60 = arith.constant 1 : i32
      %127 = vector.broadcast %c1_i32_60 : i32 to vector<1x128xi32>
      %128 = arith.cmpi eq, %108, %127 : vector<1x128xi32>
      %cst_61 = arith.constant 0.000000e+00 : f32
      %129 = vector.shape_cast %114 : vector<1x1xf32> to vector<1x1xf32>
      %130 = vector.broadcast %129 : vector<1x1xf32> to vector<1x128xf32>
      %131 = vector.broadcast %cst_61 : f32 to vector<1x128xf32>
      %132 = arith.select %128, %130, %131 : vector<1x128xi1>, vector<1x128xf32>
      %133 = arith.addf %126, %132 : vector<1x128xf32>
      %c2_i32 = arith.constant 2 : i32
      %134 = vector.broadcast %c2_i32 : i32 to vector<1x128xi32>
      %135 = arith.cmpi eq, %108, %134 : vector<1x128xi32>
      %cst_62 = arith.constant 0.000000e+00 : f32
      %136 = vector.shape_cast %117 : vector<1x1xf32> to vector<1x1xf32>
      %137 = vector.broadcast %136 : vector<1x1xf32> to vector<1x128xf32>
      %138 = vector.broadcast %cst_62 : f32 to vector<1x128xf32>
      %139 = arith.select %135, %137, %138 : vector<1x128xi1>, vector<1x128xf32>
      %140 = arith.addf %133, %139 : vector<1x128xf32>
      %c3_i32 = arith.constant 3 : i32
      %141 = vector.broadcast %c3_i32 : i32 to vector<1x128xi32>
      %142 = arith.cmpi eq, %108, %141 : vector<1x128xi32>
      %cst_63 = arith.constant 0.000000e+00 : f32
      %143 = vector.shape_cast %120 : vector<1x1xf32> to vector<1x1xf32>
      %144 = vector.broadcast %143 : vector<1x1xf32> to vector<1x128xf32>
      %145 = vector.broadcast %cst_63 : f32 to vector<1x128xf32>
      %146 = arith.select %142, %144, %145 : vector<1x128xi1>, vector<1x128xf32>
      %147 = arith.addf %140, %146 : vector<1x128xf32>
      %c0_64 = arith.constant 0 : index
      %c0_65 = arith.constant 0 : index
      %148 = vector.load %arg5[%c0_64, %c0_65] : memref<1x128xf32, #tpu.memory_space<vmem>>, vector<1x128xf32>
      tpu.vector_store %arg5[%c0_64, %c0_65], %147 {strides = array<i32>} : memref<1x128xf32, #tpu.memory_space<vmem>>, vector<1x128xf32>,
    } else {
    }
    return
  }
  func.func @transform_0(%arg0: i32, %arg1: i32) -> (i32, i32) {
    %c1_i32 = arith.constant 1 : i32
    %0 = arith.muli %arg0, %c1_i32 : i32
    %1 = arith.addi %0, %arg1 : i32
    %c0_i32 = arith.constant 0 : i32
    %c0_i32_0 = arith.constant 0 : i32
    return %c0_i32, %1 : i32, i32
  }
  func.func @transform_1(%arg0: i32, %arg1: i32) -> (i32, i32) {
    %c1_i32 = arith.constant 1 : i32
    %0 = arith.muli %arg0, %c1_i32 : i32
    %1 = arith.addi %0, %arg1 : i32
    %c0_i32 = arith.constant 0 : i32
    %c0_i32_0 = arith.constant 0 : i32
    return %c0_i32, %1 : i32, i32
  }
  func.func @transform_2(%arg0: i32, %arg1: i32) -> (i32, i32) {
    %c1_i32 = arith.constant 1 : i32
    %0 = arith.muli %arg0, %c1_i32 : i32
    %1 = arith.addi %0, %arg1 : i32
    %c0_i32 = arith.constant 0 : i32
    %c0_i32_0 = arith.constant 0 : i32
    return %c0_i32, %1 : i32, i32
  }
  func.func @transform_3(%arg0: i32, %arg1: i32) -> (i32, i32) {
    %c0_i32 = arith.constant 0 : i32
    %c0_i32_0 = arith.constant 0 : i32
    return %arg0, %c0_i32 : i32, i32
  }
}

</mosaic_0001>

<llo_original>
// kernel: tpu_custom_call.1
$region0: #{tpu_custom_call.1}
  #allocation0 [shape = 'u32[]', space=smem, size = 0x4, offset = 0x4, fixed_abs, tag = 'smem constant byte address 0x4 - core index']
  #allocation1 [shape = 'u32[144,128]{1,0:T(1,128)}', space=vmem, size = 0x12000, scoped, tag = 'internal scratch']
  #allocation2 [shape = 'f32[1,128]{1,0:T(1,128)}', space=vmem, size = 0x200, scoped, tag = 'scratch operand']
  #allocation3 [shape = 'f32[1,128]{1,0:T(1,128)}', space=vmem, size = 0x200, scoped, tag = 'scratch operand']
  #allocation4 [shape = 'f32[1,128]{1,0:T(1,128)}', space=vmem, size = 0x200, scoped, tag = 'scratch operand']
  #allocation5 [shape = 'f32[1,128]{1,0:T(1,128)}', space=vmem, size = 0x200, scoped, tag = 'scratch operand']
  %s0 = inlined_call_operand.hbm [shape: f32[16,128], index: 0, kind: input, shape index: {}]
  %s1 = inlined_call_operand.vmem [shape: f32[1,128], index: 1, kind: input, shape index: {}]
  %s2 = inlined_call_operand.vmem [shape: s32[1,128], index: 2, kind: input, shape index: {}]
  %s3 = inlined_call_operand.hbm [shape: f32[1,128], index: 3, kind: output, shape index: {}]
  %s4 = sld [smem:[#allocation0]]
  $region34: #{tpu_custom_call.1} parent=0
    _
  %s6 = ssub.s32 1, %s4
  %s7 = scalar_select 0, %s6, %s4
  $region1: #{tpu_custom_call.1} parent=0
    #allocation6 [shape = 'u8[8192]{0}', space=vmem, size = 0x2000, scoped, tag = 'input window, operand 0, single buffered']
    #allocation7 [shape = 's32[1]{0}', space=sflag, size = 0x4, scoped, tag = 'scoped memory for tpu_custom_call.1']
    #allocation8 [shape = 's32[1]{0}', space=sflag, size = 0x4, scoped, tag = 'scoped memory for tpu_custom_call.1']
    #allocation9 [shape = 'u8[512]{0}', space=vmem, size = 0x400, scoped, tag = 'output window, operand 0, single buffered']
    %8 = vsyncpa [#allocation7], 0
    %9 = vsyncpa [#allocation8], 0
    // Predicated region
    $region2: #{tpu_custom_call.1} parent=1 // pred_check
      _
    $region3: #{tpu_custom_call.1} parent=1 // pred_check_branch
      %11 = sbr.rel (0) target = $region5
    $region4: #{tpu_custom_call.1} parent=1 // pred_region
      %s12 = sadd.s32 0, 0
      %s14 = ssub.s32 256, 256
      %15 = vsyncadd [#allocation7], %s14
      %s16 = smul.addr %s12, 128
      %s17 = scalar_lea.hbm %s0, %s16
      %s18 = sshll.u32 [#allocation6], 4
      %s19 = int_to_ptr.vmem [resolvable:$true] %s18
      %24 = dma.hbm_to_vmem [thread:$0]  %s17, 256, %s19, [#allocation7], 128, 128, 8
    $region5: #{tpu_custom_call.1} parent=1 // pred_fallthru
      _
    // Predicated region
    $region6: #{tpu_custom_call.1} parent=1 // pred_check
      _
    $region7: #{tpu_custom_call.1} parent=1 // pred_check_branch
      %26 = sbr.rel (0) target = $region9
    $region8: #{tpu_custom_call.1} parent=1 // pred_region
      %s27 = sadd.s32 0, 0
      %p28 = scmp.lt.s32.totalorder %s27, 0
      %s29 = scalar_select %p28, %s27, 0
      %s30 = scalar_lea.vmem %s1, %s29
      %s31 = sadd.s32 0, 0
    $region9: #{tpu_custom_call.1} parent=1 // pred_fallthru
      _
    // Predicated region
    $region10: #{tpu_custom_call.1} parent=1 // pred_check
      _
    $region11: #{tpu_custom_call.1} parent=1 // pred_check_branch
      %33 = sbr.rel (0) target = $region13
    $region12: #{tpu_custom_call.1} parent=1 // pred_region
      %s34 = sadd.s32 0, 0
      %p35 = scmp.lt.s32.totalorder %s34, 0
      %s36 = scalar_select %p35, %s34, 0
      %s37 = scalar_lea.vmem %s2, %s36
      %s38 = sadd.s32 0, 0
    $region13: #{tpu_custom_call.1} parent=1 // pred_fallthru
      _
    // Predicated region
    $region14: #{tpu_custom_call.1} parent=1 // pred_check
      _
    $region15: #{tpu_custom_call.1} parent=1 // pred_check_branch
      %40 = sbr.rel (0) target = $region17
    $region16: #{tpu_custom_call.1} parent=1 // pred_region
      %41 = dma.done [#allocation7], 256
    $region17: #{tpu_custom_call.1} parent=1 // pred_fallthru
      _
    %s42 = sadd.s32 0, 0
    %p43 = scmp.lt.s32.totalorder %s42, 0
    %s44 = scalar_select %p43, %s42, 0
    %s45 = scalar_lea.vmem %s1, %s44
    %s46 = sadd.s32 0, 0
    %p47 = scmp.lt.s32.totalorder %s46, 0
    %s48 = scalar_select %p47, %s46, 0
    %s49 = scalar_lea.vmem %s2, %s48
    %s50 = sadd.s32 0, 0
    %s51 = sadd.s32 0, 0
    %p52 = scmp.lt.s32.totalorder %s51, 0
    %s53 = scalar_select %p52, %s51, 0
    %s54 = scalar_lea.vmem %s1, %s53
    %s55 = sadd.s32 0, 0
    %s56 = sadd.s32 0, 0
    %p57 = scmp.lt.s32.totalorder %s56, 0
    %s58 = scalar_select %p57, %s56, 0
    %s59 = scalar_lea.vmem %s2, %s58
    %s60 = sadd.s32 0, 0
    %p61 = scmp.eq.s32.totalorder 0, 0
    // Predicated region
    $region18: #{tpu_custom_call.1} parent=1 // pred_check
      %p62 = pneg %p61
    $region19: #{tpu_custom_call.1} parent=1 // pred_check_branch
      %64 = sbr.rel (%p62) target = $region21
    $region20: #{tpu_custom_call.1} parent=1 // pred_region
      %65 = vst [vmem:[#allocation2] sm:$0x1] 0.0
      %66 = vst [vmem:[#allocation3] sm:$0x1] 0.0
      %67 = vst [vmem:[#allocation4] sm:$0x1] 0.0
      %68 = vst [vmem:[#allocation5] sm:$0x1] 0.0
    $region21: #{tpu_custom_call.1} parent=1 // pred_fallthru
      _
    %v69 = vld [vmem:[#allocation6] sm:$0xff]
    %v70 = vld [vmem:[#allocation6 + $0x8] sm:$0xff]
    %v71 = vld [vmem:[%s54] sm:$0x1]
    %v72 = vld [vmem:[%s59] sm:$0x1]
    %v73 = vlaneseq
    %v74 = vshrl.u32 %v73, 7
    %v75 = vadd.s32 %v74, 8
    %v76 = vlaneseq
    %v77 = vshrl.u32 %v76, 7
    %v78 = vsub.s32 0, %v77
    %v79 = vrot.slane %v72, %v78
    %vm80 = vcmp.eq.s32.totalorder %v74, %v79
    %vm81 = vcmp.eq.s32.totalorder %v75, %v79
    %v82 = vmax.f32 %v69, %v70
    %v83 = vrot.slane %v82, 4
    %v84 = vmax.f32 %v82, %v83
    %v85 = vrot.slane %v84, 2
    %v86 = vmax.f32 %v84, %v85
    %v87 = vrot.slane %v86, 1
    %v88 = vmax.f32 %v86, %v87
    %v89 = vsub.f32 %v69, %v88
    %v90 = vsub.f32 %v70, %v88
    %v91 = vmul.f32 %v89, 1.442695
    %v92 = vpow.pop %v91
    %v93 = vmul.f32 %v90, 1.442695
    %v94 = vpow.pop %v93
    %v95 = vadd.f32 %v92, %v94
    %v96 = vrot.slane %v95, 4
    %v97 = vadd.f32 %v95, %v96
    %v98 = vrot.slane %v97, 2
    %v99 = vadd.f32 %v97, %v98
    %v100 = vrot.slane %v99, 1
    %v101 = vadd.f32 %v99, %v100
    %v102 = vrcp.pop %v101
    %v103 = vsel %vm80, %v92, 0.0
    %v104 = vsel %vm81, %v94, 0.0
    %v105 = vadd.f32 %v103, %v104
    %v106 = vrot.slane %v105, 4
    %v107 = vadd.f32 %v105, %v106
    %v108 = vrot.slane %v107, 2
    %v109 = vadd.f32 %v107, %v108
    %v110 = vrot.slane %v109, 1
    %v111 = vadd.f32 %v109, %v110
    %v112 = vmul.f32 %v111, %v102
    %vm113 = vcmp.gt.f32.partialorder %v71, 20.0
    %v114 = vmin.f32 %v71, 20.0
    %v115 = vmul.f32 %v114, 1.442695
    %v116 = vpow.pop %v115
    %v117 = vadd.f32 %v116, 1.0
    %v118 = vlog2.pop %v117
    %v119 = vmul.f32 %v118, 0.6931472
    %v120 = vmul.f32 -0.5, %v116
    %v121 = vadd.f32 %v120, 1.0
    %v122 = vmul.f32 %v121, %v116
    %v123 = vand.u32 2147483647, %v116
    %vm124 = vcmp.lt.f32.partialorder %v123, 0.0004427343
    %v125 = vsel %vm124, %v122, %v119
    %v126 = vsel %vm113, %v71, %v125
    %v127 = vadd.f32 %v126, 16.0
    %v128 = vrcp.pop %v127
    %v129 = vmul.f32 %v128, 16.0
    %v130 = vmul.f32 %v126, %v128
    %v131 = vmul.f32 %v126, %v112
    %v132 = vadd.f32 %v131, 1.0
    %v133 = vmul.f32 %v132, %v128
    %v134 = vadd.f32 %v133, 1e-05
    %v135 = vlog2.pop %v134
    %v136 = vmul.f32 %v135, 0.6931472
    %v137 = vsub.f32 0.0, %v136
    %v138 = vsub.f32 0.0, %v129
    %v139 = vadd.f32 %v112, 1e-05
    %v140 = vlog2.pop %v139
    %v141 = vmul.f32 %v140, 0.6931472
    %v142 = vmul.f32 %v138, %v141
    %vm143 = vcmp.eq.f32.partialorder %v69, %v88
    %vm144 = vcmp.eq.f32.partialorder %v70, %v88
    %v145 = vsel %vm143, %v74, 16
    %v146 = vsel %vm144, %v75, 16
    %vm147 = vcmp.lt.s32.totalorder %v145, %v146
    %v148 = vsel %vm147, %v145, %v146
    %v149 = vrot.slane %v148, 4
    %vm150 = vcmp.lt.s32.totalorder %v148, %v149
    %v151 = vsel %vm150, %v148, %v149
    %v152 = vrot.slane %v151, 2
    %vm153 = vcmp.lt.s32.totalorder %v151, %v152
    %v154 = vsel %vm153, %v151, %v152
    %v155 = vrot.slane %v154, 1
    %vm156 = vcmp.lt.s32.totalorder %v154, %v155
    %v157 = vsel %vm156, %v154, %v155
    %vm158 = vcmp.eq.s32.totalorder %v157, %v72
    %v159 = vsel %vm158, 1, 0
    %v160 = vcvt.s32.f32 %v159
    %v161 = vsub.f32 0.0, %v133
    %v162 = vadd.f32 %v130, 1e-05
    %v163 = vlog2.pop %v162
    %v164 = vmul.f32 %v163, 0.6931472
    %v165 = vmul.f32 %v161, %v164
    %v166 = vsub.f32 1.0, %v133
    %v167 = vadd.f32 %v129, 1e-05
    %v168 = vlog2.pop %v167
    %v169 = vmul.f32 %v168, 0.6931472
    %v170 = vmul.f32 %v166, %v169
    %v171 = vsub.f32 %v165, %v170
    %v172 = vadd.f32 %v137, %v142
    %v173 = vmul.f32 %v160, %v171
    %v174 = vsub.f32 1.0, %v160
    %v175 = vmul.f32 %v174, %v171
    %s176 = sadd.s32 0, 0
    %s177 = smul.u32 %s176, 128
    %v178 = vlaneseq
    %v179 = vand.u32 %v178, 127
    %v180 = vstv %s177
    %v181 = vadd.s32 %v180, %v179
    %vm182 = vcmp.lt.s32.totalorder %v181, 64
    %v183 = vsel %vm182, %v172, 0.0
    %v184 = vsel %vm182, %v173, 0.0
    %v185 = vsel %vm182, %v175, 0.0
    %v186 = vsel %vm182, %v160, 0.0
    %v187 = vld [vmem:[#allocation2] sm:$0x1]
    %v188 = vadd.f32 %v187, %v183
    %189 = vst [vmem:[#allocation2] sm:$0x1] %v188
    %v190 = vld [vmem:[#allocation3] sm:$0x1]
    %v191 = vadd.f32 %v190, %v184
    %192 = vst [vmem:[#allocation3] sm:$0x1] %v191
    %v193 = vld [vmem:[#allocation4] sm:$0x1]
    %v194 = vadd.f32 %v193, %v185
    %195 = vst [vmem:[#allocation4] sm:$0x1] %v194
    %v196 = vld [vmem:[#allocation5] sm:$0x1]
    %v197 = vadd.f32 %v196, %v186
    %198 = vst [vmem:[#allocation5] sm:$0x1] %v197
    // Predicated region
    $region22: #{tpu_custom_call.1} parent=1 // pred_check
      %p199 = pneg %p61
    $region23: #{tpu_custom_call.1} parent=1 // pred_check_branch
      %201 = sbr.rel (%p199) target = $region25
    $region24: #{tpu_custom_call.1} parent=1 // pred_region
      %v202 = vld [vmem:[#allocation2] sm:$0x1]
      %vm203 = vcmask 1040384
      %v204 = vsel %vm203, %v202, 0.0
      %205 = vadd.xlane.f32.xlu0 %v204
      %v206 = vpop.xlane.xlu0 %205
      %v207 = vld [vmem:[#allocation3] sm:$0x1]
      %v208 = vsel %vm203, %v207, 0.0
      %209 = vadd.xlane.f32.xlu0 %v208
      %v210 = vpop.xlane.xlu0 %209
      %v211 = vld [vmem:[#allocation4] sm:$0x1]
      %v212 = vsel %vm203, %v211, 0.0
      %213 = vadd.xlane.f32.xlu0 %v212
      %v214 = vpop.xlane.xlu0 %213
      %v215 = vld [vmem:[#allocation5] sm:$0x1]
      %v216 = vsel %vm203, %v215, 0.0
      %217 = vadd.xlane.f32.xlu0 %v216
      %v218 = vpop.xlane.xlu0 %217
      %vm219 = vcmp.eq.s32.totalorder %v179, 0
      %v220 = vsel %vm219, %v206, 0.0
      %vm221 = vcmp.eq.s32.totalorder %v179, 1
      %v222 = vsel %vm221, %v210, 0.0
      %v223 = vadd.f32 %v220, %v222
      %vm224 = vcmp.eq.s32.totalorder %v179, 2
      %v225 = vsel %vm224, %v214, 0.0
      %v226 = vadd.f32 %v223, %v225
      %vm227 = vcmp.eq.s32.totalorder %v179, 3
      %v228 = vsel %vm227, %v218, 0.0
      %v229 = vadd.f32 %v226, %v228
      %230 = vst [vmem:[#allocation9] sm:$0x1] %v229
    $region25: #{tpu_custom_call.1} parent=1 // pred_fallthru
      _
    // Predicated region
    $region26: #{tpu_custom_call.1} parent=1 // pred_check
      _
    $region27: #{tpu_custom_call.1} parent=1 // pred_check_branch
      %232 = sbr.rel (0) target = $region29
    $region28: #{tpu_custom_call.1} parent=1 // pred_region
      %s234 = ssub.s32 16, 16
      %235 = vsyncadd [#allocation8], %s234
      %s237 = sshll.u32 [#allocation9], 4
      %s238 = int_to_ptr.vmem [resolvable:$true] %s237
      %240 = dma.vmem_to_hbm [thread:$0]  %s238, 16, %s3, [#allocation8]
    $region29: #{tpu_custom_call.1} parent=1 // pred_fallthru
      _
    // Predicated region
    $region30: #{tpu_custom_call.1} parent=1 // pred_check
      _
    $region31: #{tpu_custom_call.1} parent=1 // pred_check_branch
      %242 = sbr.rel (0) target = $region33
    $region32: #{tpu_custom_call.1} parent=1 // pred_region
      %243 = dma.done [#allocation8], 16
    $region33: #{tpu_custom_call.1} parent=1 // pred_fallthru
      _
    %244 = vsyncpa [#allocation7], 1
    %245 = vsyncpa [#allocation8], 1

</llo_original>
